<compile_context>
chip_gen: v5e
topology: v5e:2x2
jax: 0.10.0
libtpu: 0.0.40
codegen_flags: <defaults>
</compile_context>

<pallas_src>
import jax
import jax.numpy as jnp
from jax.experimental import pallas as pl
from jax.experimental.pallas import tpu as pltpu


def _round_up(n, m):
    return -(-n // m) * m


def _mlp_kernel(x_ref, w1_ref, b1_ref, w2t_ref, b2t_ref, o_ref):
    # In-kernel bf16 cast of the streamed activations (hidden under the DMA).
    x = x_ref[...].astype(jnp.bfloat16)
    # Layer 1: (TB, F)bf16 @ (F, 256)bf16 -> f32 accumulation on the MXU.
    h = jnp.dot(x, w1_ref[...], preferred_element_type=jnp.float32)
    # Bias + ReLU in f32 on the VPU (v5e has no bf16 VPU).
    h = jnp.maximum(h + b1_ref[...], 0.0)
    # Layer 2, transposed (q @ k.T style contraction over the 256 hidden dim):
    # (CPAD, 256)bf16 x (TB, 256)bf16 -> (CPAD, TB) f32.  Keeps writeback at
    # CPAD (=16) f32 per batch row instead of 128 zero-padded lanes.
    out_t = jax.lax.dot_general(
        w2t_ref[...], h.astype(jnp.bfloat16),
        dimension_numbers=(((1,), (1,)), ((), ())),
        preferred_element_type=jnp.float32)
    o_ref[...] = out_t + b2t_ref[...]


def prepare_params(w1, b1, w2, b2):
    """One-time parameter prep (hoisted out of the forward pass).

    Args (PyTorch-equivalent layouts, already transposed to math layout):
      w1: (F, 256) f32, b1: (..., 256) f32, w2: (256, C) f32, b2: (..., C) f32
    Returns:
      (w1_bf, b1_row, w2t, b2t): device-ready kernel parameters.
    """
    f, hidden = w1.shape
    n_class = w2.shape[1]
    cpad = _round_up(max(n_class, 8), 16)        # bf16 sublane packing for w2t

    w1_bf = w1.astype(jnp.bfloat16)
    b1_row = jnp.asarray(b1, jnp.float32).reshape(1, hidden)
    w2t = jnp.zeros((cpad, hidden), jnp.bfloat16)
    w2t = w2t.at[:n_class, :].set(w2.T.astype(jnp.bfloat16))
    b2t = jnp.zeros((cpad, 1), jnp.float32)
    b2t = b2t.at[:n_class, 0].set(jnp.asarray(b2, jnp.float32).reshape(-1))
    return w1_bf, b1_row, w2t, b2t


def normal_nn_forward(x, params, n_class, *, tb=1024):
    """Fused forward pass of NormalNN.

    Args:
      x:        (..., input_features) f32 (flattened to (-1, input_features)).
      params:   output of prepare_params().
      n_class:  number of real classes.
      tb:       batch tile (rows per grid step); must be a multiple of 128.
    Returns:
      (B, n_class) f32 logits.
    """
    w1_bf, b1_row, w2t, b2t = params
    input_features, hidden = w1_bf.shape
    cpad = w2t.shape[0]

    if tb % 128 != 0:
        raise ValueError("tb must be a multiple of 128 (lane-dense output)")

    x = x.reshape(-1, input_features)            # matches x.view(-1, F)
    b = x.shape[0]

    # Effective tile: never larger than the (128-rounded) batch, and keep at
    # least 2 grid steps for mid/large batches so v7x megacore load-balances.
    tb_eff = min(tb, _round_up(b, 128))
    if b > 128:
        tb_eff = min(tb_eff, _round_up(-(-b // 2), 128))
    tb_eff = max(tb_eff, 128)
    grid = (pl.cdiv(b, tb_eff),)                 # ragged last block is clipped

    out_t = pl.pallas_call(
        _mlp_kernel,
        out_shape=jax.ShapeDtypeStruct((cpad, b), jnp.float32),
        grid_spec=pltpu.PrefetchScalarGridSpec(
            num_scalar_prefetch=0,
            grid=grid,
            in_specs=[
                # Activations stream per batch tile (f32; cast in-kernel).
                pl.BlockSpec((tb_eff, input_features), lambda i: (i, 0)),
                # Weights / biases: constant blocks -> DMA'd once, VMEM-resident.
                pl.BlockSpec((input_features, hidden), lambda i: (0, 0)),
                pl.BlockSpec((1, hidden), lambda i: (0, 0)),
                pl.BlockSpec((cpad, hidden), lambda i: (0, 0)),
                pl.BlockSpec((cpad, 1), lambda i: (0, 0)),
            ],
            # Transposed logits: batch tiles march along the lane axis.
            out_specs=pl.BlockSpec((cpad, tb_eff), lambda i: (0, i)),
        ),
        compiler_params=pltpu.CompilerParams(
            # Batch axis is independent -> shard across TCs on v7x megacore.
            dimension_semantics=("parallel",),
            # Valid on v5e/v6e (128 MiB physical) and v7x (64 MiB physical).
            vmem_limit_bytes=32 * 1024 * 1024,
        ),
    )(x, w1_bf, b1_row, w2t, b2t)

    # Tiny (cpad, B) -> (B, n_class) transpose + slice in the wrapper.
    return out_t[:n_class, :].T


def init_params(key, input_features, n_class, hidden=256):
    """Deterministic init mimicking nn.Linear default (uniform +/- 1/sqrt(fan_in))."""
    k1, k2, k3, k4 = jax.random.split(key, 4)
    lim1 = 1.0 / jnp.sqrt(jnp.float32(input_features))
    lim2 = 1.0 / jnp.sqrt(jnp.float32(hidden))
    w1 = jax.random.uniform(k1, (input_features, hidden), jnp.float32, -lim1, lim1)
    b1 = jax.random.uniform(k2, (1, hidden), jnp.float32, -lim1, lim1)
    w2 = jax.random.uniform(k3, (hidden, n_class), jnp.float32, -lim2, lim2)
    b2 = jax.random.uniform(k4, (1, n_class), jnp.float32, -lim2, lim2)
    return w1, b1, w2, b2


if __name__ == "__main__":
    input_features = 32
    n_class = 10
    batch = 200          # not a multiple of 128 -> exercises the ragged block

    key = jax.random.PRNGKey(0)
    kx, kp = jax.random.split(key)

    # Input may come in any shape; forward flattens to (-1, input_features).
    x_raw = jax.random.normal(kx, (batch, 1, input_features), jnp.float32)

    w1, b1, w2, b2 = init_params(kp, input_features, n_class)

    # One-time parameter prep (not redone per forward call).
    params = prepare_params(w1, b1, w2, b2)

    out = normal_nn_forward(x_raw, params, n_class)   # tile clamp -> grid of 2
    jax.block_until_ready(out)

    # Reference check in plain JAX (f32). Kernel runs the dots in bf16 with
    # f32 accumulation, so tolerance is loosened accordingly.
    x_flat = x_raw.reshape(-1, input_features)
    ref = jnp.maximum(x_flat @ w1 + b1, 0.0) @ w2 + b2
    assert out.shape == (batch, n_class)
    assert jnp.allclose(out, ref, atol=3e-2, rtol=3e-2), (
        float(jnp.max(jnp.abs(out - ref))))

    print("KERNEL_OK")
</pallas_src>

<mosaic_0001>
module attributes {stable_mosaic.version = 11 : i64} {
  func.func @_mlp_kernel(%arg0: i32, %arg1: memref<128x32xf32, #tpu.memory_space<vmem>>, %arg2: memref<32x256xbf16, #tpu.memory_space<vmem>>, %arg3: memref<1x256xf32, #tpu.memory_space<vmem>>, %arg4: memref<16x256xbf16, #tpu.memory_space<vmem>>, %arg5: memref<16x1xf32, #tpu.memory_space<vmem>>, %arg6: memref<16x128xf32, #tpu.memory_space<vmem>>) attributes {dimension_semantics = [#tpu.dimension_semantics<parallel>], iteration_bounds = array<i64: 2>, scalar_prefetch = 0 : i64, scratch_operands = 0 : i64, tpu.core_type = #tpu.core_type<tc>, window_params = [{transform_indices = @transform_0, window_bounds = array<i64: 128, 32>}, {pipeline_mode = #tpu.pipeline_mode<synchronous>, transform_indices = @transform_1, window_bounds = array<i64: 32, 256>}, {pipeline_mode = #tpu.pipeline_mode<synchronous>, transform_indices = @transform_2, window_bounds = array<i64: 1, 256>}, {pipeline_mode = #tpu.pipeline_mode<synchronous>, transform_indices = @transform_3, window_bounds = array<i64: 16, 256>}, {pipeline_mode = #tpu.pipeline_mode<synchronous>, transform_indices = @transform_4, window_bounds = array<i64: 16, 1>}, {transform_indices = @transform_5, window_bounds = array<i64: 16, 128>}]} {
    %c0 = arith.constant 0 : index
    %c0_0 = arith.constant 0 : index
    %0 = vector.load %arg1[%c0, %c0_0] : memref<128x32xf32, #tpu.memory_space<vmem>>, vector<128x32xf32>
    %1 = arith.truncf %0 : vector<128x32xf32> to vector<128x32xbf16>
    %c0_1 = arith.constant 0 : index
    %c0_2 = arith.constant 0 : index
    %2 = vector.load %arg2[%c0_1, %c0_2] : memref<32x256xbf16, #tpu.memory_space<vmem>>, vector<32x256xbf16>
    %cst = arith.constant dense<0.000000e+00> : vector<128x256xf32>
    %3 = tpu.matmul %1, %2, %cst {dimension_numbers = #tpu.dot_dimension_numbers<[1], [0], [0], [1], [0, 0, 1, 1], [], []>} : vector<128x32xbf16>, vector<32x256xbf16>, vector<128x256xf32> -> vector<128x256xf32>
    %c0_3 = arith.constant 0 : index
    %c0_4 = arith.constant 0 : index
    %4 = vector.load %arg3[%c0_3, %c0_4] : memref<1x256xf32, #tpu.memory_space<vmem>>, vector<1x256xf32>
    %5 = vector.broadcast %4 : vector<1x256xf32> to vector<128x256xf32>
    %6 = arith.addf %3, %5 : vector<128x256xf32>
    %cst_5 = arith.constant 0.000000e+00 : f32
    %7 = vector.broadcast %cst_5 : f32 to vector<128x256xf32>
    %8 = arith.maximumf %6, %7 : vector<128x256xf32>
    %c0_6 = arith.constant 0 : index
    %c0_7 = arith.constant 0 : index
    %9 = vector.load %arg4[%c0_6, %c0_7] : memref<16x256xbf16, #tpu.memory_space<vmem>>, vector<16x256xbf16>
    %10 = arith.truncf %8 : vector<128x256xf32> to vector<128x256xbf16>
    %cst_8 = arith.constant dense<0.000000e+00> : vector<16x128xf32>
    %11 = tpu.matmul %9, %10, %cst_8 {dimension_numbers = #tpu.dot_dimension_numbers<[1], [1], [0], [0], [0, 0, 1, 0], [], []>} : vector<16x256xbf16>, vector<128x256xbf16>, vector<16x128xf32> -> vector<16x128xf32>
    %c0_9 = arith.constant 0 : index
    %c0_10 = arith.constant 0 : index
    %12 = vector.load %arg5[%c0_9, %c0_10] : memref<16x1xf32, #tpu.memory_space<vmem>>, vector<16x1xf32>
    %13 = vector.broadcast %12 : vector<16x1xf32> to vector<16x128xf32>
    %14 = arith.addf %11, %13 : vector<16x128xf32>
    %c0_11 = arith.constant 0 : index
    %c0_12 = arith.constant 0 : index
    %15 = vector.load %arg6[%c0_11, %c0_12] : memref<16x128xf32, #tpu.memory_space<vmem>>, vector<16x128xf32>
    tpu.vector_store %arg6[%c0_11, %c0_12], %14 {strides = array<i32>} : memref<16x128xf32, #tpu.memory_space<vmem>>, vector<16x128xf32>,
    return
  }
  func.func @transform_0(%arg0: i32) -> (i32, i32) {
    %c0_i32 = arith.constant 0 : i32
    %c0_i32_0 = arith.constant 0 : i32
    return %arg0, %c0_i32 : i32, i32
  }
  func.func @transform_1(%arg0: i32) -> (i32, i32) {
    %c0_i32 = arith.constant 0 : i32
    %c0_i32_0 = arith.constant 0 : i32
    %c0_i32_1 = arith.constant 0 : i32
    return %c0_i32, %c0_i32_0 : i32, i32
  }
  func.func @transform_2(%arg0: i32) -> (i32, i32) {
    %c0_i32 = arith.constant 0 : i32
    %c0_i32_0 = arith.constant 0 : i32
    %c0_i32_1 = arith.constant 0 : i32
    return %c0_i32, %c0_i32_0 : i32, i32
  }
  func.func @transform_3(%arg0: i32) -> (i32, i32) {
    %c0_i32 = arith.constant 0 : i32
    %c0_i32_0 = arith.constant 0 : i32
    %c0_i32_1 = arith.constant 0 : i32
    return %c0_i32, %c0_i32_0 : i32, i32
  }
  func.func @transform_4(%arg0: i32) -> (i32, i32) {
    %c0_i32 = arith.constant 0 : i32
    %c0_i32_0 = arith.constant 0 : i32
    %c0_i32_1 = arith.constant 0 : i32
    return %c0_i32, %c0_i32_0 : i32, i32
  }
  func.func @transform_5(%arg0: i32) -> (i32, i32) {
    %c0_i32 = arith.constant 0 : i32
    %c0_i32_0 = arith.constant 0 : i32
    return %c0_i32, %arg0 : i32, i32
  }
}

</mosaic_0001>

<llo_original>
// kernel: tpu_custom_call.1
$region0: #{tpu_custom_call.1}
  #allocation0 [shape = 'u32[]', space=smem, size = 0x4, offset = 0x4, fixed_abs, tag = 'smem constant byte address 0x4 - core index']
  #allocation1 [shape = 'u32[72,128]{1,0:T(1,128)}', space=vmem, size = 0x9000, scoped, tag = 'internal scratch']
  %s0 = inlined_call_operand.vmem [shape: f32[200,32], index: 0, kind: input, shape index: {}]
  %s1 = inlined_call_operand.vmem [shape: bf16[32,256], index: 1, kind: input, shape index: {}]
  %s2 = inlined_call_operand.vmem [shape: f32[1,256], index: 2, kind: input, shape index: {}]
  %s3 = inlined_call_operand.vmem [shape: bf16[16,256], index: 3, kind: input, shape index: {}]
  %s4 = inlined_call_operand.vmem [shape: f32[16,1], index: 4, kind: input, shape index: {}]
  %s5 = inlined_call_operand.hbm [shape: f32[16,200], index: 5, kind: output, shape index: {}]
  %s6 = sld [smem:[#allocation0]]
  $region53: #{tpu_custom_call.1} parent=0
    _
  %s8 = ssub.s32 1, %s6
  %s9 = scalar_select 0, %s8, %s6
  $region1: #{tpu_custom_call.1} parent=0
    #allocation2 [shape = 'u8[16384]{0}', space=vmem, size = 0x4000, scoped, tag = 'output window, operand 0']
    #allocation3 [shape = 's32[2]{0}', space=sflag, size = 0x8, scoped, tag = 'scoped memory for tpu_custom_call.1']
    %10 = vsyncpa [#allocation3], 0
    %s11 = scalar_lea.sflag [#allocation3], 1
    %12 = vsyncpa %s11, 0
    loop: start=0, step=1, limit=4
    $region2: #{tpu_custom_call.1} parent=1 // loop_pre_header
      _
    $region3: #{tpu_custom_call.1} parent=1 // loop_header
      %s14 = sphi 0, %s18
      %p15 = scmp.ge.s32.totalorder %s14, 4
      %s24 = sphi 0, %s26
      %s27 = sphi 0, %s24
      %s28 = sphi 0, %s27
      %s44 = sphi 0, %s28
      %s48 = sphi 0, %s48
      %s50 = sphi 0, %s48
      %s51 = sphi 0, %s50
      %s65 = sphi 0, %s51
      %s69 = sphi 0, %s69
      %s71 = sphi 0, %s69
      %s72 = sphi 0, %s71
      %s86 = sphi 0, %s72
      %s90 = sphi 0, %s90
      %s92 = sphi 0, %s90
      %s93 = sphi 0, %s92
      %s107 = sphi 0, %s93
      %s111 = sphi 0, %s111
      %s113 = sphi 0, %s111
      %s114 = sphi 0, %s113
      %s128 = sphi 0, %s114
      %s134 = sphi 0, %s136
      %s137 = sphi 0, %s134
      %s138 = sphi 0, %s137
      %s154 = sphi 0, %s138
    $region4: #{tpu_custom_call.1} parent=1 // loop_header_branch
      %17 = sbr.rel (%p15) target = $region8
    $region5: #{tpu_custom_call.1} parent=1 // loop_body
      %s19 = ssub.s32 %s14, 1
      %s20 = ssub.s32 %s14, 2
      %s21 = sadd.s32 %s14, 1
      %s22 = ssub.s32 %s14, %s21
      %p23 = scmp.eq.s32.totalorder %s22, 0
      %s25 = sadd.s32 %s24, 1
      %s26 = scalar_select %p23, %s24, %s25
      %p29 = pneg %p23
      %p30 = scmp.eq.s32.totalorder %s14, 1
      %p31 = por %p29, %p30
      %p32 = scmp.ne.s32.totalorder %s24, %s27
      %p33 = scmp.eq.s32.totalorder %s14, 0
      %p34 = por %p32, %p33
      %p35 = scmp.ne.s32.totalorder %s24, %s27
      %p36 = scmp.eq.s32.totalorder %s19, 1
      %p37 = por %p35, %p36
      %p38 = scmp.ne.s32.totalorder %s27, %s28
      %p39 = scmp.eq.s32.totalorder %s19, 0
      %p40 = por %p38, %p39
      %p41 = scmp.ne.s32.totalorder %s27, %s28
      %p42 = scmp.eq.s32.totalorder %s20, 1
      %p43 = por %p41, %p42
      %p45 = scmp.ne.s32.totalorder %s28, %s44
      %p46 = scmp.eq.s32.totalorder %s20, 0
      %p47 = por %p45, %p46
      %s49 = sadd.s32 %s48, 1
      %p52 = scmp.eq.s32.totalorder %s14, 1
      %p53 = scmp.ne.s32.totalorder %s48, %s50
      %p54 = scmp.eq.s32.totalorder %s14, 0
      %p55 = por %p53, %p54
      %p56 = scmp.ne.s32.totalorder %s48, %s50
      %p57 = scmp.eq.s32.totalorder %s19, 1
      %p58 = por %p56, %p57
      %p59 = scmp.ne.s32.totalorder %s50, %s51
      %p60 = scmp.eq.s32.totalorder %s19, 0
      %p61 = por %p59, %p60
      %p62 = scmp.ne.s32.totalorder %s50, %s51
      %p63 = scmp.eq.s32.totalorder %s20, 1
      %p64 = por %p62, %p63
      %p66 = scmp.ne.s32.totalorder %s51, %s65
      %p67 = scmp.eq.s32.totalorder %s20, 0
      %p68 = por %p66, %p67
      %s70 = sadd.s32 %s69, 1
      %p73 = scmp.eq.s32.totalorder %s14, 1
      %p74 = scmp.ne.s32.totalorder %s69, %s71
      %p75 = scmp.eq.s32.totalorder %s14, 0
      %p76 = por %p74, %p75
      %p77 = scmp.ne.s32.totalorder %s69, %s71
      %p78 = scmp.eq.s32.totalorder %s19, 1
      %p79 = por %p77, %p78
      %p80 = scmp.ne.s32.totalorder %s71, %s72
      %p81 = scmp.eq.s32.totalorder %s19, 0
      %p82 = por %p80, %p81
      %p83 = scmp.ne.s32.totalorder %s71, %s72
      %p84 = scmp.eq.s32.totalorder %s20, 1
      %p85 = por %p83, %p84
      %p87 = scmp.ne.s32.totalorder %s72, %s86
      %p88 = scmp.eq.s32.totalorder %s20, 0
      %p89 = por %p87, %p88
      %s91 = sadd.s32 %s90, 1
      %p94 = scmp.eq.s32.totalorder %s14, 1
      %p95 = scmp.ne.s32.totalorder %s90, %s92
      %p96 = scmp.eq.s32.totalorder %s14, 0
      %p97 = por %p95, %p96
      %p98 = scmp.ne.s32.totalorder %s90, %s92
      %p99 = scmp.eq.s32.totalorder %s19, 1
      %p100 = por %p98, %p99
      %p101 = scmp.ne.s32.totalorder %s92, %s93
      %p102 = scmp.eq.s32.totalorder %s19, 0
      %p103 = por %p101, %p102
      %p104 = scmp.ne.s32.totalorder %s92, %s93
      %p105 = scmp.eq.s32.totalorder %s20, 1
      %p106 = por %p104, %p105
      %p108 = scmp.ne.s32.totalorder %s93, %s107
      %p109 = scmp.eq.s32.totalorder %s20, 0
      %p110 = por %p108, %p109
      %s112 = sadd.s32 %s111, 1
      %p115 = scmp.eq.s32.totalorder %s14, 1
      %p116 = scmp.ne.s32.totalorder %s111, %s113
      %p117 = scmp.eq.s32.totalorder %s14, 0
      %p118 = por %p116, %p117
      %p119 = scmp.ne.s32.totalorder %s111, %s113
      %p120 = scmp.eq.s32.totalorder %s19, 1
      %p121 = por %p119, %p120
      %p122 = scmp.ne.s32.totalorder %s113, %s114
      %p123 = scmp.eq.s32.totalorder %s19, 0
      %p124 = por %p122, %p123
      %p125 = scmp.ne.s32.totalorder %s113, %s114
      %p126 = scmp.eq.s32.totalorder %s20, 1
      %p127 = por %p125, %p126
      %p129 = scmp.ne.s32.totalorder %s114, %s128
      %p130 = scmp.eq.s32.totalorder %s20, 0
      %p131 = por %p129, %p130
      %s132 = ssub.s32 %s14, %s21
      %p133 = scmp.eq.s32.totalorder %s132, 0
      %s135 = sadd.s32 %s134, 1
      %s136 = scalar_select %p133, %s134, %s135
      %p139 = pneg %p133
      %p140 = scmp.eq.s32.totalorder %s14, 1
      %p141 = por %p139, %p140
      %p142 = scmp.ne.s32.totalorder %s134, %s137
      %p143 = scmp.eq.s32.totalorder %s14, 0
      %p144 = por %p142, %p143
      %p145 = scmp.ne.s32.totalorder %s134, %s137
      %p146 = scmp.eq.s32.totalorder %s19, 1
      %p147 = por %p145, %p146
      %p148 = scmp.ne.s32.totalorder %s137, %s138
      %p149 = scmp.eq.s32.totalorder %s19, 0
      %p150 = por %p148, %p149
      %p151 = scmp.ne.s32.totalorder %s137, %s138
      %p152 = scmp.eq.s32.totalorder %s20, 1
      %p153 = por %p151, %p152
      %p155 = scmp.ne.s32.totalorder %s138, %s154
      %p156 = scmp.eq.s32.totalorder %s20, 0
      %p157 = por %p155, %p156
      %p158 = scmp.le.s32.totalorder 1, %s14
      %p159 = scmp.lt.s32.totalorder %s14, 3
      %p160 = pnand %p158, %p159
      %p161 = pneg %p160
      // Predicated region
      $region9: #{tpu_custom_call.1} parent=5 // pred_check
        _
      $region10: #{tpu_custom_call.1} parent=5 // pred_check_branch
        %163 = sbr.rel (%p160) target = $region12
      $region11: #{tpu_custom_call.1} parent=5 // pred_region
        %s164 = ssub.s32 %s14, 1
        // Predicated region
        $region13: #{tpu_custom_call.1} parent=11 // pred_check
          %p165 = pneg %p61
        $region14: #{tpu_custom_call.1} parent=11 // pred_check_branch
          %167 = sbr.rel (%p165) target = $region16
        $region15: #{tpu_custom_call.1} parent=11 // pred_region
          _
        $region16: #{tpu_custom_call.1} parent=11 // pred_fallthru
          _
        // Predicated region
        $region17: #{tpu_custom_call.1} parent=11 // pred_check
          %p168 = pneg %p82
        $region18: #{tpu_custom_call.1} parent=11 // pred_check_branch
          %170 = sbr.rel (%p168) target = $region20
        $region19: #{tpu_custom_call.1} parent=11 // pred_region
          _
        $region20: #{tpu_custom_call.1} parent=11 // pred_fallthru
          _
        // Predicated region
        $region21: #{tpu_custom_call.1} parent=11 // pred_check
          %p171 = pneg %p103
        $region22: #{tpu_custom_call.1} parent=11 // pred_check_branch
          %173 = sbr.rel (%p171) target = $region24
        $region23: #{tpu_custom_call.1} parent=11 // pred_region
          _
        $region24: #{tpu_custom_call.1} parent=11 // pred_fallthru
          _
        // Predicated region
        $region25: #{tpu_custom_call.1} parent=11 // pred_check
          %p174 = pneg %p124
        $region26: #{tpu_custom_call.1} parent=11 // pred_check_branch
          %176 = sbr.rel (%p174) target = $region28
        $region27: #{tpu_custom_call.1} parent=11 // pred_region
          _
        $region28: #{tpu_custom_call.1} parent=11 // pred_fallthru
          _
      $region12: #{tpu_custom_call.1} parent=5 // pred_fallthru
        _
      %p177 = scmp.lt.s32.totalorder %s14, 2
      // Predicated region
      $region29: #{tpu_custom_call.1} parent=5 // pred_check
        %p178 = pneg %p177
      $region30: #{tpu_custom_call.1} parent=5 // pred_check_branch
        %180 = sbr.rel (%p178) target = $region32
      $region31: #{tpu_custom_call.1} parent=5 // pred_region
        // Predicated region
        $region33: #{tpu_custom_call.1} parent=31 // pred_check
          %p181 = pneg %p34
        $region34: #{tpu_custom_call.1} parent=31 // pred_check_branch
          %183 = sbr.rel (%p181) target = $region36
        $region35: #{tpu_custom_call.1} parent=31 // pred_region
          %s184 = smul.u32 16, %s14
          %s185 = ssub.s32 25, %s184
          %p186 = scmp.lt.s32.totalorder %s185, 16
          %s187 = scalar_select %p186, %s185, 16
          %s188 = smul.u32 8, %s187
          %p189 = scmp.lt.s32.totalorder %s184, 24
          %s190 = scalar_select %p189, %s184, 24
          %s191 = smul.addr %s190, 8
          %s192 = scalar_lea.vmem %s0, %s191
          %s193 = smul.u32 16, %s14
          %s194 = ssub.s32 25, %s193
          %p195 = scmp.lt.s32.totalorder %s194, 16
          %s196 = scalar_select %p195, %s194, 16
          %s197 = smul.u32 8, %s196
        $region36: #{tpu_custom_call.1} parent=31 // pred_fallthru
          _
      $region32: #{tpu_custom_call.1} parent=5 // pred_fallthru
        _
      %p198 = scmp.le.s32.totalorder 1, %s14
      %p199 = scmp.lt.s32.totalorder %s14, 3
      %p200 = pnand %p198, %p199
      %p201 = pneg %p200
      // Predicated region
      $region37: #{tpu_custom_call.1} parent=5 // pred_check
        _
      $region38: #{tpu_custom_call.1} parent=5 // pred_check_branch
        %203 = sbr.rel (%p200) target = $region40
      $region39: #{tpu_custom_call.1} parent=5 // pred_region
        %s204 = ssub.s32 %s14, 1
        %s205 = smul.u32 16, %s19
        %s206 = ssub.s32 25, %s205
        %p207 = scmp.lt.s32.totalorder %s206, 16
        %s208 = scalar_select %p207, %s206, 16
        %s209 = smul.u32 8, %s208
        %p210 = scmp.lt.s32.totalorder %s205, 24
        %s211 = scalar_select %p210, %s205, 24
        %s212 = smul.addr %s211, 8
        %s213 = scalar_lea.vmem %s0, %s212
        %p214 = pneg %p40
        %p215 = pneg %p37
        %p216 = pneg %p61
        %p217 = pneg %p58
        %p218 = pneg %p82
        %p219 = pneg %p79
        %p220 = pneg %p103
        %p221 = pneg %p100
        %p222 = pneg %p124
        %p223 = pneg %p121
        %p224 = pneg %p150
        %p225 = pneg %p147
        %s226 = sand.u32 %s137, 1
        %s227 = scalar_lea.sflag [#allocation3], %s226
        %s228 = sand.u32 %s137, 1
        %s229 = smul.addr %s228, 16
        %s230 = scalar_lea.vmem [#allocation2], %s229
        %s231 = smul.u32 16, %s19
        %s232 = ssub.s32 25, %s231
        %p233 = scmp.lt.s32.totalorder %s232, 16
        %s234 = scalar_select %p233, %s232, 16
        %s235 = smul.u32 8, %s234
        %p236 = scmp.lt.s32.totalorder %s231, 24
        %s237 = scalar_select %p236, %s231, 24
        %s238 = smul.addr %s237, 8
        %s239 = scalar_lea.vmem %s0, %s238
        %s240 = smul.u32 16, %s19
        %s241 = ssub.s32 25, %s240
        %p242 = scmp.lt.s32.totalorder %s241, 16
        %s243 = scalar_select %p242, %s241, 16
        %s244 = smul.u32 8, %s243
        %v246 = vld [vmem:[%s239] sm:$0xff]
        %v247 = vld [vmem:[%s239 + $0x8] sm:$0xff]
        %v248 = vld [vmem:[%s239 + $0x10] sm:$0xff]
        %v249 = vld [vmem:[%s239 + $0x18] sm:$0xff]
        %v250 = vld [vmem:[%s239 + $0x20] sm:$0xff]
        %v251 = vld [vmem:[%s239 + $0x28] sm:$0xff]
        %v252 = vld [vmem:[%s239 + $0x30] sm:$0xff]
        %v253 = vld [vmem:[%s239 + $0x38] sm:$0xff]
        %v254 = vld [vmem:[%s239 + $0x40] sm:$0xff]
        %v255 = vld [vmem:[%s239 + $0x48] sm:$0xff]
        %v256 = vld [vmem:[%s239 + $0x50] sm:$0xff]
        %v257 = vld [vmem:[%s239 + $0x58] sm:$0xff]
        %v258 = vld [vmem:[%s239 + $0x60] sm:$0xff]
        %v259 = vld [vmem:[%s239 + $0x68] sm:$0xff]
        %v260 = vld [vmem:[%s239 + $0x70] sm:$0xff]
        %v261 = vld [vmem:[%s239 + $0x78] sm:$0xff]
        %v262 = vpack.c.bf16 %v247, %v246
        %v263 = vpack.c.bf16 %v249, %v248
        %v264 = vpack.c.bf16 %v251, %v250
        %v265 = vpack.c.bf16 %v253, %v252
        %v266 = vpack.c.bf16 %v255, %v254
        %v267 = vpack.c.bf16 %v257, %v256
        %v268 = vpack.c.bf16 %v259, %v258
        %v269 = vpack.c.bf16 %v261, %v260
        %v270 = vld [vmem:[%s1] sm:$0xff]
        %v271 = vld [vmem:[%s1 + $0x8] sm:$0xff]
        %v272 = vld [vmem:[%s1 + $0x10] sm:$0xff]
        %v273 = vld [vmem:[%s1 + $0x18] sm:$0xff]
        %v274 = vld [vmem:[%s2] sm:$0x3]
        %v276 = vperm.slane %v274, 0
        %v277 = vperm.slane %v274, 1
        %v284 = vunpack.c.l.b16 %v270
        %v285 = vunpack.c.h.b16 %v270
        %v286 = vunpack.c.l.b16 %v271
        %v287 = vunpack.c.h.b16 %v271
        %v288 = vunpack.c.l.b16 %v272
        %v289 = vunpack.c.h.b16 %v272
        %v290 = vunpack.c.l.b16 %v273
        %v291 = vunpack.c.h.b16 %v273
        %v292 = vpack.c.b16 %v286, %v284
        %v293 = vpack.c.b16 %v287, %v285
        %v294 = vpack.c.b16 %v290, %v288
        %v295 = vpack.c.b16 %v291, %v289
        %vm300 = vcmask 261120
        %v302 = vsel %vm300, %v262, 0
        %v305 = vsel %vm300, %v263, 0
        %v308 = vsel %vm300, %v264, 0
        %v311 = vsel %vm300, %v265, 0
        %v314 = vsel %vm300, %v266, 0
        %v317 = vsel %vm300, %v267, 0
        %v320 = vsel %vm300, %v268, 0
        %v323 = vsel %vm300, %v269, 0
        %325 = vmatpush.bf16.msra.mxu0 0
        %326 = vmatpush.bf16.msra.mxu0 0
        %327 = vmatpush.bf16.msra.mxu0 0
        %328 = vmatpush.bf16.msra.mxu0 0
        %329 = vmatpush.bf16.msra.mxu0 0
        %330 = vmatpush.bf16.msra.mxu0 0
        %331 = vmatpush.bf16.msra.mxu0 %v294
        %332 = vmatpush.bf16.msra.mxu0 %v292
        %333 = vmatmul.bf16.gmra.mxu0 %v302
        %v334 = vpop.f32.mrf.mxu0
        %v335 = vadd.f32 %v276, %v334
        %v336 = vpop.f32.mrf.mxu0
        %v337 = vadd.f32 %v276, %v336
        %338 = vmatmul.bf16.gmra.mxu0 %v305
        %v339 = vpop.f32.mrf.mxu0
        %v340 = vadd.f32 %v276, %v339
        %v341 = vpop.f32.mrf.mxu0
        %v342 = vadd.f32 %v276, %v341
        %343 = vmatmul.bf16.gmra.mxu0 %v308
        %v344 = vpop.f32.mrf.mxu0
        %v345 = vadd.f32 %v276, %v344
        %v346 = vpop.f32.mrf.mxu0
        %v347 = vadd.f32 %v276, %v346
        %348 = vmatmul.bf16.gmra.mxu0 %v311
        %v349 = vpop.f32.mrf.mxu0
        %v350 = vadd.f32 %v276, %v349
        %v351 = vpop.f32.mrf.mxu0
        %v352 = vadd.f32 %v276, %v351
        %353 = vmatmul.bf16.gmra.mxu0 %v314
        %v354 = vpop.f32.mrf.mxu0
        %v355 = vadd.f32 %v276, %v354
        %v356 = vpop.f32.mrf.mxu0
        %v357 = vadd.f32 %v276, %v356
        %358 = vmatmul.bf16.gmra.mxu0 %v317
        %v359 = vpop.f32.mrf.mxu0
        %v360 = vadd.f32 %v276, %v359
        %v361 = vpop.f32.mrf.mxu0
        %v362 = vadd.f32 %v276, %v361
        %363 = vmatmul.bf16.gmra.mxu0 %v320
        %v364 = vpop.f32.mrf.mxu0
        %v365 = vadd.f32 %v276, %v364
        %v366 = vpop.f32.mrf.mxu0
        %v367 = vadd.f32 %v276, %v366
        %368 = vmatmul.bf16.gmra.mxu0 %v323
        %v369 = vpop.f32.mrf.mxu0
        %v370 = vadd.f32 %v276, %v369
        %v371 = vpop.f32.mrf.mxu0
        %v372 = vadd.f32 %v276, %v371
        %373 = vdwg.mxu0
        %374 = vmatpush.bf16.msra.mxu0 0
        %375 = vmatpush.bf16.msra.mxu0 0
        %376 = vmatpush.bf16.msra.mxu0 0
        %377 = vmatpush.bf16.msra.mxu0 0
        %378 = vmatpush.bf16.msra.mxu0 0
        %379 = vmatpush.bf16.msra.mxu0 0
        %380 = vmatpush.bf16.msra.mxu0 %v295
        %381 = vmatpush.bf16.msra.mxu0 %v293
        %382 = vmatmul.bf16.gmra.mxu0 %v302
        %v383 = vpop.f32.mrf.mxu0
        %v384 = vadd.f32 %v277, %v383
        %v385 = vpop.f32.mrf.mxu0
        %v386 = vadd.f32 %v277, %v385
        %387 = vmatmul.bf16.gmra.mxu0 %v305
        %v388 = vpop.f32.mrf.mxu0
        %v389 = vadd.f32 %v277, %v388
        %v390 = vpop.f32.mrf.mxu0
        %v391 = vadd.f32 %v277, %v390
        %392 = vmatmul.bf16.gmra.mxu0 %v308
        %v393 = vpop.f32.mrf.mxu0
        %v394 = vadd.f32 %v277, %v393
        %v395 = vpop.f32.mrf.mxu0
        %v396 = vadd.f32 %v277, %v395
        %397 = vmatmul.bf16.gmra.mxu0 %v311
        %v398 = vpop.f32.mrf.mxu0
        %v399 = vadd.f32 %v277, %v398
        %v400 = vpop.f32.mrf.mxu0
        %v401 = vadd.f32 %v277, %v400
        %402 = vmatmul.bf16.gmra.mxu0 %v314
        %v403 = vpop.f32.mrf.mxu0
        %v404 = vadd.f32 %v277, %v403
        %v405 = vpop.f32.mrf.mxu0
        %v406 = vadd.f32 %v277, %v405
        %407 = vmatmul.bf16.gmra.mxu0 %v317
        %v408 = vpop.f32.mrf.mxu0
        %v409 = vadd.f32 %v277, %v408
        %v410 = vpop.f32.mrf.mxu0
        %v411 = vadd.f32 %v277, %v410
        %412 = vmatmul.bf16.gmra.mxu0 %v320
        %v413 = vpop.f32.mrf.mxu0
        %v414 = vadd.f32 %v277, %v413
        %v415 = vpop.f32.mrf.mxu0
        %v416 = vadd.f32 %v277, %v415
        %417 = vmatmul.bf16.gmra.mxu0 %v323
        %v418 = vpop.f32.mrf.mxu0
        %v419 = vadd.f32 %v277, %v418
        %v420 = vpop.f32.mrf.mxu0
        %v421 = vadd.f32 %v277, %v420
        %422 = vdwg.mxu0
        %v423 = vmax.f32 %v335, 0.0
        %v424 = vmax.f32 %v384, 0.0
        %v425 = vmax.f32 %v337, 0.0
        %v426 = vmax.f32 %v386, 0.0
        %v427 = vmax.f32 %v340, 0.0
        %v428 = vmax.f32 %v389, 0.0
        %v429 = vmax.f32 %v342, 0.0
        %v430 = vmax.f32 %v391, 0.0
        %v431 = vmax.f32 %v345, 0.0
        %v432 = vmax.f32 %v394, 0.0
        %v433 = vmax.f32 %v347, 0.0
        %v434 = vmax.f32 %v396, 0.0
        %v435 = vmax.f32 %v350, 0.0
        %v436 = vmax.f32 %v399, 0.0
        %v437 = vmax.f32 %v352, 0.0
        %v438 = vmax.f32 %v401, 0.0
        %v439 = vmax.f32 %v355, 0.0
        %v440 = vmax.f32 %v404, 0.0
        %v441 = vmax.f32 %v357, 0.0
        %v442 = vmax.f32 %v406, 0.0
        %v443 = vmax.f32 %v360, 0.0
        %v444 = vmax.f32 %v409, 0.0
        %v445 = vmax.f32 %v362, 0.0
        %v446 = vmax.f32 %v411, 0.0
        %v447 = vmax.f32 %v365, 0.0
        %v448 = vmax.f32 %v414, 0.0
        %v449 = vmax.f32 %v367, 0.0
        %v450 = vmax.f32 %v416, 0.0
        %v451 = vmax.f32 %v370, 0.0
        %v452 = vmax.f32 %v419, 0.0
        %v453 = vmax.f32 %v372, 0.0
        %v454 = vmax.f32 %v421, 0.0
        %v455 = vld [vmem:[%s3] sm:$0xff]
        %v456 = vld [vmem:[%s3 + $0x8] sm:$0xff]
        %v457 = vpack.c.bf16 %v425, %v423
        %v458 = vpack.c.bf16 %v426, %v424
        %v459 = vpack.c.bf16 %v429, %v427
        %v460 = vpack.c.bf16 %v430, %v428
        %v461 = vpack.c.bf16 %v433, %v431
        %v462 = vpack.c.bf16 %v434, %v432
        %v463 = vpack.c.bf16 %v437, %v435
        %v464 = vpack.c.bf16 %v438, %v436
        %v465 = vpack.c.bf16 %v441, %v439
        %v466 = vpack.c.bf16 %v442, %v440
        %v467 = vpack.c.bf16 %v445, %v443
        %v468 = vpack.c.bf16 %v446, %v444
        %v469 = vpack.c.bf16 %v449, %v447
        %v470 = vpack.c.bf16 %v450, %v448
        %v471 = vpack.c.bf16 %v453, %v451
        %v472 = vpack.c.bf16 %v454, %v452
        %v473 = vld [vmem:[%s4] sm:$0xff]
        %v474 = vld [vmem:[%s4 + $0x8] sm:$0xff]
        %476 = vset.pattern.permute.xlu0 0
        %477 = vperm.xlu0 %476, %v473
        %v478 = vpop.permute.xlu0 %477
        %481 = vset.pattern.permute.xlu0 0
        %482 = vperm.xlu0 %481, %v474
        %v483 = vpop.permute.xlu0 %482
        %v487 = vunpack.c.l.b16 %v455
        %v488 = vunpack.c.h.b16 %v455
        %v489 = vunpack.c.l.b16 %v456
        %v490 = vunpack.c.h.b16 %v456
        %v491 = vpack.c.b16 %v489, %v487
        %v492 = vpack.c.b16 %v490, %v488
        %495 = vmatpush.bf16.xpose.msra.mxu0 %v471
        %496 = vmatpush.bf16.xpose.msra.mxu0 %v469
        %497 = vmatpush.bf16.xpose.msra.mxu0 %v467
        %498 = vmatpush.bf16.xpose.msra.mxu0 %v465
        %499 = vmatpush.bf16.xpose.msra.mxu0 %v463
        %500 = vmatpush.bf16.xpose.msra.mxu0 %v461
        %501 = vmatpush.bf16.xpose.msra.mxu0 %v459
        %502 = vmatpush.bf16.xpose.msra.mxu0 %v457
        %503 = vmatmul.bf16.gmra.mxu0 %v491
        %v504 = vpop.f32.mrf.mxu0
        %v505 = vadd.f32 %v478, %v504
        %v506 = vpop.f32.mrf.mxu0
        %v507 = vadd.f32 %v483, %v506
        %508 = vdwg.mxu0
        %509 = vmatpush.bf16.xpose.msra.mxu0 %v472
        %510 = vmatpush.bf16.xpose.msra.mxu0 %v470
        %511 = vmatpush.bf16.xpose.msra.mxu0 %v468
        %512 = vmatpush.bf16.xpose.msra.mxu0 %v466
        %513 = vmatpush.bf16.xpose.msra.mxu0 %v464
        %514 = vmatpush.bf16.xpose.msra.mxu0 %v462
        %515 = vmatpush.bf16.xpose.msra.mxu0 %v460
        %516 = vmatpush.bf16.xpose.msra.mxu0 %v458
        %517 = vmatmul.bf16.gmra.mxu0 %v492
        %v518 = vpop.f32.mrf.mxu0
        %v519 = vadd.f32 %v505, %v518
        %v520 = vpop.f32.mrf.mxu0
        %v521 = vadd.f32 %v507, %v520
        %522 = vdwg.mxu0
        %523 = vst [vmem:[%s230] sm:$0xff] %v519
        %524 = vst [vmem:[%s230 + $0x8] sm:$0xff] %v521
        %s525 = sand.u32 %s137, 1
        %s526 = scalar_lea.sflag [#allocation3], %s525
        %s527 = sand.u32 %s137, 1
        %s528 = smul.addr %s527, 16
        %s529 = scalar_lea.vmem [#allocation2], %s528
        // Predicated region
        $region41: #{tpu_custom_call.1} parent=39 // pred_check
          %p530 = pneg %p147
        $region42: #{tpu_custom_call.1} parent=39 // pred_check_branch
          %532 = sbr.rel (%p530) target = $region44
        $region43: #{tpu_custom_call.1} parent=39 // pred_region
          %534 = vsyncadd %s526, 0
          %s535 = smul.addr %s19, 8
          %s536 = scalar_lea.hbm %s5, %s535
          %s537 = sshll.u32 %s529, 4
          %s538 = int_to_ptr.vmem [resolvable:$true] %s537
          %s539 = sshll.u32 %s536, 4
          %s540 = int_to_ptr.hbm [resolvable:$true] %s539
          %545 = dma.vmem_to_hbm [thread:$0]  %s538, 256, %s540, %s526, 128, 256, 8
        $region44: #{tpu_custom_call.1} parent=39 // pred_fallthru
          _
      $region40: #{tpu_custom_call.1} parent=5 // pred_fallthru
        _
      %p546 = scmp.le.s32.totalorder 2, %s14
      // Predicated region
      $region45: #{tpu_custom_call.1} parent=5 // pred_check
        %p547 = pneg %p546
      $region46: #{tpu_custom_call.1} parent=5 // pred_check_branch
        %549 = sbr.rel (%p547) target = $region48
      $region47: #{tpu_custom_call.1} parent=5 // pred_region
        %s550 = ssub.s32 %s14, 2
        // Predicated region
        $region49: #{tpu_custom_call.1} parent=47 // pred_check
          %p551 = pneg %p153
        $region50: #{tpu_custom_call.1} parent=47 // pred_check_branch
          %553 = sbr.rel (%p551) target = $region52
        $region51: #{tpu_custom_call.1} parent=47 // pred_region
          %s554 = sand.u32 %s138, 1
          %s555 = scalar_lea.sflag [#allocation3], %s554
          %s556 = sand.u32 %s138, 1
          %s557 = smul.addr %s556, 16
          %s558 = scalar_lea.vmem [#allocation2], %s557
          %560 = dma.done %s555, 256
        $region52: #{tpu_custom_call.1} parent=47 // pred_fallthru
          _
      $region48: #{tpu_custom_call.1} parent=5 // pred_fallthru
        _
    $region6: #{tpu_custom_call.1} parent=1 // loop_footer
      %s18 = sadd.s32 1, %s14
    $region7: #{tpu_custom_call.1} parent=1 // loop_footer_branch
      %13 = sbr.rel target = $region3
    $region8: #{tpu_custom_call.1} parent=1 // loop_exit
      _
    %561 = vsyncpa [#allocation3], 1
    %s562 = scalar_lea.sflag [#allocation3], 1
    %563 = vsyncpa %s562, 1

</llo_original>
